<compile_context>
chip_gen: v7x
topology: tpu7x:2x2x1
jax: 0.10.0
libtpu: 0.0.40
codegen_flags: <defaults>
</compile_context>

<pallas_src>
import jax
import jax.numpy as jnp
from jax.experimental import pallas as pl
from jax.experimental.pallas import tpu as pltpu


def _normalize_kernel(scale_ref, bias_ref, img_ref, out_ref):
    # scale_ref/bias_ref: VMEM (1, C, 1); img_ref/out_ref: VMEM (1, C, S_BLK).
    # out = img * (1/std) + (-mean/std)  ==  (img - mean) / std
    out_ref[...] = img_ref[...] * scale_ref[...] + bias_ref[...]


def _choose_spatial_block(hw, c, itemsize, max_block_bytes=2 * 1024 * 1024):
    """Largest lane-dense spatial tile (multiple of 128 that divides hw) whose
    (C, tile) block stays under the per-block VMEM budget. Falls back to the
    full spatial extent (always a legal block shape)."""
    if c * hw * itemsize <= max_block_bytes:
        return hw
    max_s = max_block_bytes // (c * itemsize)
    s = (max_s // 128) * 128
    while s >= 128:
        if hw % s == 0:
            return s
        s -= 128
    return hw  # pathological shapes only; full extent is always legal


def normalization_forward(img, mean, std_dev):
    """img: (N, C, H, W); mean/std_dev: (C,). Returns (img - mean[c]) / std[c]."""
    N, C, H, W = img.shape
    HW = H * W
    dtype = img.dtype
    itemsize = jnp.dtype(dtype).itemsize

    # Precompute per-channel scale/bias so the kernel avoids per-element divide.
    mean_f = mean.astype(jnp.float32)
    std_f = std_dev.astype(jnp.float32)
    scale = (1.0 / std_f).astype(dtype).reshape(1, C, 1)
    bias = (-(mean_f / std_f)).astype(dtype).reshape(1, C, 1)

    # Lane-dense layout: flatten spatial dims so the lane axis is H*W.
    img3 = img.reshape(N, C, HW)

    s_blk = _choose_spatial_block(HW, C, itemsize)
    n_s = HW // s_blk

    out3 = pl.pallas_call(
        _normalize_kernel,
        out_shape=jax.ShapeDtypeStruct((N, C, HW), dtype),
        grid=(N, n_s),
        in_specs=[
            pl.BlockSpec((1, C, 1), lambda n, s: (0, 0, 0)),      # scale (broadcast)
            pl.BlockSpec((1, C, 1), lambda n, s: (0, 0, 0)),      # bias  (broadcast)
            pl.BlockSpec((1, C, s_blk), lambda n, s: (n, 0, s)),  # image slab
        ],
        out_specs=pl.BlockSpec((1, C, s_blk), lambda n, s: (n, 0, s)),
        compiler_params=pltpu.CompilerParams(
            dimension_semantics=("parallel", "parallel"),
        ),
        cost_estimate=pl.CostEstimate(
            flops=2 * N * C * HW,
            transcendentals=0,
            bytes_accessed=2 * N * C * HW * itemsize + 2 * C * itemsize,
        ),
    )(scale, bias, img3)

    return out3.reshape(N, C, H, W)


if __name__ == "__main__":
    # Parameters from the module's defaults (deterministic, in-script).
    mean = jnp.array([0.485, 0.456, 0.406], dtype=jnp.float32)
    std_dev = jnp.array([0.229, 0.224, 0.225], dtype=jnp.float32)

    # Small NCHW input consistent with the 3-channel ImageNet convention.
    key = jax.random.PRNGKey(0)
    img = jax.random.uniform(key, (2, 3, 16, 16), dtype=jnp.float32)

    out = normalization_forward(img, mean, std_dev)
    out = jax.block_until_ready(out)

    # Reference check in plain JAX (same broadcasting as PyTorch view(-1,1,1)).
    ref = (img - mean[None, :, None, None]) / std_dev[None, :, None, None]
    assert out.shape == img.shape and out.dtype == img.dtype
    assert jnp.allclose(out, ref, atol=1e-5, rtol=1e-5), "mismatch vs reference"

    print("KERNEL_OK")
</pallas_src>

<mosaic_0001>
module attributes {stable_mosaic.version = 11 : i64} {
  func.func @_normalize_kernel(%arg0: i32, %arg1: i32, %arg2: memref<1x3x1xf32, #tpu.memory_space<vmem>>, %arg3: memref<1x3x1xf32, #tpu.memory_space<vmem>>, %arg4: memref<1x3x256xf32, #tpu.memory_space<vmem>>, %arg5: memref<1x3x256xf32, #tpu.memory_space<vmem>>) attributes {dimension_semantics = [#tpu.dimension_semantics<parallel>, #tpu.dimension_semantics<parallel>], iteration_bounds = array<i64: 2, 1>, scalar_prefetch = 0 : i64, scratch_operands = 0 : i64, tpu.core_type = #tpu.core_type<tc>, window_params = [{pipeline_mode = #tpu.pipeline_mode<synchronous>, transform_indices = @transform_0, window_bounds = array<i64: 1, 3, 1>}, {pipeline_mode = #tpu.pipeline_mode<synchronous>, transform_indices = @transform_1, window_bounds = array<i64: 1, 3, 1>}, {transform_indices = @transform_2, window_bounds = array<i64: 1, 3, 256>}, {transform_indices = @transform_3, window_bounds = array<i64: 1, 3, 256>}]} {
    %c0 = arith.constant 0 : index
    %c0_0 = arith.constant 0 : index
    %c0_1 = arith.constant 0 : index
    %0 = vector.load %arg4[%c0, %c0_0, %c0_1] : memref<1x3x256xf32, #tpu.memory_space<vmem>>, vector<1x3x256xf32>
    %c0_2 = arith.constant 0 : index
    %c0_3 = arith.constant 0 : index
    %c0_4 = arith.constant 0 : index
    %1 = vector.load %arg2[%c0_2, %c0_3, %c0_4] : memref<1x3x1xf32, #tpu.memory_space<vmem>>, vector<1x3x1xf32>
    %2 = vector.broadcast %1 : vector<1x3x1xf32> to vector<1x3x256xf32>
    %3 = arith.mulf %0, %2 : vector<1x3x256xf32>
    %c0_5 = arith.constant 0 : index
    %c0_6 = arith.constant 0 : index
    %c0_7 = arith.constant 0 : index
    %4 = vector.load %arg3[%c0_5, %c0_6, %c0_7] : memref<1x3x1xf32, #tpu.memory_space<vmem>>, vector<1x3x1xf32>
    %5 = vector.broadcast %4 : vector<1x3x1xf32> to vector<1x3x256xf32>
    %6 = arith.addf %3, %5 : vector<1x3x256xf32>
    %c0_8 = arith.constant 0 : index
    %c0_9 = arith.constant 0 : index
    %c0_10 = arith.constant 0 : index
    %7 = vector.load %arg5[%c0_8, %c0_9, %c0_10] : memref<1x3x256xf32, #tpu.memory_space<vmem>>, vector<1x3x256xf32>
    tpu.vector_store %arg5[%c0_8, %c0_9, %c0_10], %6 {strides = array<i32>} : memref<1x3x256xf32, #tpu.memory_space<vmem>>, vector<1x3x256xf32>,
    return
  }
  func.func @transform_0(%arg0: i32, %arg1: i32) -> (i32, i32, i32) {
    %c0_i32 = arith.constant 0 : i32
    %c0_i32_0 = arith.constant 0 : i32
    %c0_i32_1 = arith.constant 0 : i32
    %c0_i32_2 = arith.constant 0 : i32
    return %c0_i32, %c0_i32_0, %c0_i32_1 : i32, i32, i32
  }
  func.func @transform_1(%arg0: i32, %arg1: i32) -> (i32, i32, i32) {
    %c0_i32 = arith.constant 0 : i32
    %c0_i32_0 = arith.constant 0 : i32
    %c0_i32_1 = arith.constant 0 : i32
    %c0_i32_2 = arith.constant 0 : i32
    return %c0_i32, %c0_i32_0, %c0_i32_1 : i32, i32, i32
  }
  func.func @transform_2(%arg0: i32, %arg1: i32) -> (i32, i32, i32) {
    %c0_i32 = arith.constant 0 : i32
    %c0_i32_0 = arith.constant 0 : i32
    return %arg0, %c0_i32, %arg1 : i32, i32, i32
  }
  func.func @transform_3(%arg0: i32, %arg1: i32) -> (i32, i32, i32) {
    %c0_i32 = arith.constant 0 : i32
    %c0_i32_0 = arith.constant 0 : i32
    return %arg0, %c0_i32, %arg1 : i32, i32, i32
  }
}

</mosaic_0001>

<llo_original>
// kernel: tpu_custom_call.1
$region0: #{tpu_custom_call.1}
  #allocation0 [shape = 'u32[]', space=smem, size = 0x4, offset = 0x4, fixed_abs, tag = 'smem constant byte address 0x4 - core index']
  #allocation1 [shape = 'u32[144,128]{1,0:T(1,128)}', space=vmem, size = 0x12000, scoped, tag = 'internal scratch']
  %s0 = inlined_call_operand.vmem [shape: f32[1,3,1], index: 0, kind: input, shape index: {}]
  %s1 = inlined_call_operand.vmem [shape: f32[1,3,1], index: 1, kind: input, shape index: {}]
  %s2 = inlined_call_operand.vmem [shape: f32[2,3,256], index: 2, kind: input, shape index: {}]
  %s3 = inlined_call_operand.vmem [shape: f32[2,3,256], index: 3, kind: output, shape index: {}]
  %s4 = sld [smem:[#allocation0]]
  $region45: #{tpu_custom_call.1} parent=0
    _
  %s6 = ssub.s32 1, %s4
  %s7 = scalar_select 0, %s6, %s4
  loop: start=0, step=1, limit=4
  $region2: #{tpu_custom_call.1} parent=0 // loop_pre_header
    _
  $region3: #{tpu_custom_call.1} parent=0 // loop_header
    %s9 = sphi 0, %s13
    %p10 = scmp.ge.s32.totalorder %s9, 4
    %s16 = sphi 0, %s28
    %s17 = sphi 0, %s24
    %s18 = sphi 0, %s16
    %s19 = sphi 0, %s17
    %s20 = sphi 0, %s18
    %s21 = sphi 0, %s19
    %s29 = sphi 0, %s29
    %s31 = sphi 0, %s29
    %s32 = sphi 0, %s31
    %s46 = sphi 0, %s32
    %s50 = sphi 0, %s50
    %s52 = sphi 0, %s50
    %s53 = sphi 0, %s52
    %s67 = sphi 0, %s53
    %s75 = sphi 0, %s77
    %s78 = sphi 0, %s75
    %s79 = sphi 0, %s78
    %s95 = sphi 0, %s79
    %s103 = sphi 0, %s105
    %s106 = sphi 0, %s103
    %s107 = sphi 0, %s106
    %s123 = sphi 0, %s107
  $region4: #{tpu_custom_call.1} parent=0 // loop_header_branch
    %12 = sbr.rel (%p10) target = $region8
  $region5: #{tpu_custom_call.1} parent=0 // loop_body
    %s14 = ssub.s32 %s9, 1
    %s15 = ssub.s32 %s9, 2
    %s22 = sadd.s32 1, %s17
    %p23 = scmp.ge.s32.totalorder %s22, 1
    %s24 = scalar_select %p23, 0, %s22
    %s25 = sadd.s32 1, %s16
    %s26 = scalar_select %p23, %s25, %s16
    %p27 = scmp.ge.s32.totalorder %s26, 2
    %s28 = scalar_select %p27, 0, %s26
    %s30 = sadd.s32 %s29, 1
    %p33 = scmp.eq.s32.totalorder %s9, 1
    %p34 = scmp.ne.s32.totalorder %s29, %s31
    %p35 = scmp.eq.s32.totalorder %s9, 0
    %p36 = por %p34, %p35
    %p37 = scmp.ne.s32.totalorder %s29, %s31
    %p38 = scmp.eq.s32.totalorder %s14, 1
    %p39 = por %p37, %p38
    %p40 = scmp.ne.s32.totalorder %s31, %s32
    %p41 = scmp.eq.s32.totalorder %s14, 0
    %p42 = por %p40, %p41
    %p43 = scmp.ne.s32.totalorder %s31, %s32
    %p44 = scmp.eq.s32.totalorder %s15, 1
    %p45 = por %p43, %p44
    %p47 = scmp.ne.s32.totalorder %s32, %s46
    %p48 = scmp.eq.s32.totalorder %s15, 0
    %p49 = por %p47, %p48
    %s51 = sadd.s32 %s50, 1
    %p54 = scmp.eq.s32.totalorder %s9, 1
    %p55 = scmp.ne.s32.totalorder %s50, %s52
    %p56 = scmp.eq.s32.totalorder %s9, 0
    %p57 = por %p55, %p56
    %p58 = scmp.ne.s32.totalorder %s50, %s52
    %p59 = scmp.eq.s32.totalorder %s14, 1
    %p60 = por %p58, %p59
    %p61 = scmp.ne.s32.totalorder %s52, %s53
    %p62 = scmp.eq.s32.totalorder %s14, 0
    %p63 = por %p61, %p62
    %p64 = scmp.ne.s32.totalorder %s52, %s53
    %p65 = scmp.eq.s32.totalorder %s15, 1
    %p66 = por %p64, %p65
    %p68 = scmp.ne.s32.totalorder %s53, %s67
    %p69 = scmp.eq.s32.totalorder %s15, 0
    %p70 = por %p68, %p69
    %s71 = ssub.s32 %s16, %s28
    %s72 = ssub.s32 %s17, %s24
    %s73 = sor.u32 %s71, %s72
    %p74 = scmp.eq.s32.totalorder %s73, 0
    %s76 = sadd.s32 %s75, 1
    %s77 = scalar_select %p74, %s75, %s76
    %p80 = pneg %p74
    %p81 = scmp.eq.s32.totalorder %s9, 1
    %p82 = por %p80, %p81
    %p83 = scmp.ne.s32.totalorder %s75, %s78
    %p84 = scmp.eq.s32.totalorder %s9, 0
    %p85 = por %p83, %p84
    %p86 = scmp.ne.s32.totalorder %s75, %s78
    %p87 = scmp.eq.s32.totalorder %s14, 1
    %p88 = por %p86, %p87
    %p89 = scmp.ne.s32.totalorder %s78, %s79
    %p90 = scmp.eq.s32.totalorder %s14, 0
    %p91 = por %p89, %p90
    %p92 = scmp.ne.s32.totalorder %s78, %s79
    %p93 = scmp.eq.s32.totalorder %s15, 1
    %p94 = por %p92, %p93
    %p96 = scmp.ne.s32.totalorder %s79, %s95
    %p97 = scmp.eq.s32.totalorder %s15, 0
    %p98 = por %p96, %p97
    %s99 = ssub.s32 %s16, %s28
    %s100 = ssub.s32 %s17, %s24
    %s101 = sor.u32 %s99, %s100
    %p102 = scmp.eq.s32.totalorder %s101, 0
    %s104 = sadd.s32 %s103, 1
    %s105 = scalar_select %p102, %s103, %s104
    %p108 = pneg %p102
    %p109 = scmp.eq.s32.totalorder %s9, 1
    %p110 = por %p108, %p109
    %p111 = scmp.ne.s32.totalorder %s103, %s106
    %p112 = scmp.eq.s32.totalorder %s9, 0
    %p113 = por %p111, %p112
    %p114 = scmp.ne.s32.totalorder %s103, %s106
    %p115 = scmp.eq.s32.totalorder %s14, 1
    %p116 = por %p114, %p115
    %p117 = scmp.ne.s32.totalorder %s106, %s107
    %p118 = scmp.eq.s32.totalorder %s14, 0
    %p119 = por %p117, %p118
    %p120 = scmp.ne.s32.totalorder %s106, %s107
    %p121 = scmp.eq.s32.totalorder %s15, 1
    %p122 = por %p120, %p121
    %p124 = scmp.ne.s32.totalorder %s107, %s123
    %p125 = scmp.eq.s32.totalorder %s15, 0
    %p126 = por %p124, %p125
    %p127 = scmp.le.s32.totalorder 1, %s9
    %p128 = scmp.lt.s32.totalorder %s9, 3
    %p129 = pnand %p127, %p128
    %p130 = pneg %p129
    // Predicated region
    $region9: #{tpu_custom_call.1} parent=5 // pred_check
      _
    $region10: #{tpu_custom_call.1} parent=5 // pred_check_branch
      %132 = sbr.rel (%p129) target = $region12
    $region11: #{tpu_custom_call.1} parent=5 // pred_region
      %s133 = ssub.s32 %s9, 1
      // Predicated region
      $region13: #{tpu_custom_call.1} parent=11 // pred_check
        %p134 = pneg %p42
      $region14: #{tpu_custom_call.1} parent=11 // pred_check_branch
        %136 = sbr.rel (%p134) target = $region16
      $region15: #{tpu_custom_call.1} parent=11 // pred_region
        _
      $region16: #{tpu_custom_call.1} parent=11 // pred_fallthru
        _
      // Predicated region
      $region17: #{tpu_custom_call.1} parent=11 // pred_check
        %p137 = pneg %p63
      $region18: #{tpu_custom_call.1} parent=11 // pred_check_branch
        %139 = sbr.rel (%p137) target = $region20
      $region19: #{tpu_custom_call.1} parent=11 // pred_region
        _
      $region20: #{tpu_custom_call.1} parent=11 // pred_fallthru
        _
    $region12: #{tpu_custom_call.1} parent=5 // pred_fallthru
      _
    %p140 = scmp.lt.s32.totalorder %s9, 2
    // Predicated region
    $region21: #{tpu_custom_call.1} parent=5 // pred_check
      %p141 = pneg %p140
    $region22: #{tpu_custom_call.1} parent=5 // pred_check_branch
      %143 = sbr.rel (%p141) target = $region24
    $region23: #{tpu_custom_call.1} parent=5 // pred_region
      // Predicated region
      $region25: #{tpu_custom_call.1} parent=23 // pred_check
        %p144 = pneg %p85
      $region26: #{tpu_custom_call.1} parent=23 // pred_check_branch
        %146 = sbr.rel (%p144) target = $region28
      $region27: #{tpu_custom_call.1} parent=23 // pred_region
        %s147 = smul.u32 2, %s17
        %p148 = scmp.lt.s32.totalorder %s16, 1
        %s149 = scalar_select %p148, %s16, 1
        %p150 = scmp.lt.s32.totalorder %s147, 1
        %s151 = scalar_select %p150, %s147, 1
        %s152 = smul.addr %s149, 2
        %s153 = sadd.s32 %s151, %s152
        %s154 = smul.addr %s153, 4
        %s155 = scalar_lea.vmem %s2, %s154
        %s156 = smul.u32 2, %s17
      $region28: #{tpu_custom_call.1} parent=23 // pred_fallthru
        _
    $region24: #{tpu_custom_call.1} parent=5 // pred_fallthru
      _
    %p157 = scmp.le.s32.totalorder 1, %s9
    %p158 = scmp.lt.s32.totalorder %s9, 3
    %p159 = pnand %p157, %p158
    %p160 = pneg %p159
    // Predicated region
    $region29: #{tpu_custom_call.1} parent=5 // pred_check
      _
    $region30: #{tpu_custom_call.1} parent=5 // pred_check_branch
      %162 = sbr.rel (%p159) target = $region32
    $region31: #{tpu_custom_call.1} parent=5 // pred_region
      %s163 = ssub.s32 %s9, 1
      %p164 = pneg %p42
      %p165 = pneg %p39
      %p166 = pneg %p63
      %p167 = pneg %p60
      %s168 = smul.u32 2, %s19
      %p169 = scmp.lt.s32.totalorder %s18, 1
      %s170 = scalar_select %p169, %s18, 1
      %p171 = scmp.lt.s32.totalorder %s168, 1
      %s172 = scalar_select %p171, %s168, 1
      %s173 = smul.addr %s170, 2
      %s174 = sadd.s32 %s172, %s173
      %s175 = smul.addr %s174, 4
      %s176 = scalar_lea.vmem %s2, %s175
      %p177 = pneg %p91
      %p178 = pneg %p88
      %p179 = pneg %p119
      %p180 = pneg %p116
      %s181 = smul.u32 2, %s19
      %p182 = scmp.lt.s32.totalorder %s18, 1
      %s183 = scalar_select %p182, %s18, 1
      %p184 = scmp.lt.s32.totalorder %s181, 1
      %s185 = scalar_select %p184, %s181, 1
      %s186 = smul.addr %s183, 2
      %s187 = sadd.s32 %s185, %s186
      %s188 = smul.addr %s187, 4
      %s189 = scalar_lea.vmem %s3, %s188
      %s190 = smul.u32 2, %s19
      %p191 = scmp.lt.s32.totalorder %s18, 1
      %s192 = scalar_select %p191, %s18, 1
      %p193 = scmp.lt.s32.totalorder %s190, 1
      %s194 = scalar_select %p193, %s190, 1
      %s195 = smul.addr %s192, 2
      %s196 = sadd.s32 %s194, %s195
      %s197 = smul.addr %s196, 4
      %s198 = scalar_lea.vmem %s2, %s197
      %s199 = smul.u32 2, %s19
      %s200 = smul.u32 2, %s19
      %p201 = scmp.lt.s32.totalorder %s18, 1
      %s202 = scalar_select %p201, %s18, 1
      %p203 = scmp.lt.s32.totalorder %s200, 1
      %s204 = scalar_select %p203, %s200, 1
      %s205 = smul.addr %s202, 2
      %s206 = sadd.s32 %s204, %s205
      %s207 = smul.addr %s206, 4
      %s208 = scalar_lea.vmem %s3, %s207
      %s209 = smul.u32 2, %s19
      %v210 = vld [vmem:[%s198] sm:$0x77]
      %v211 = vld [vmem:[%s0] sm:$0x7]
      %213 = vset.pattern.permute.xlu0 0
      %214 = vperm.xlu0 %213, %v211
      %v215 = vpop.permute.xlu0 %214
      %v217 = vunpack.c.l.s4 839922192
      %v218 = vunpack.c.0.s8 %v217
      %v219 = vlaneseq
      %v220 = vshrl.u32 %v219, 7
      %v221 = vsub.s32 %v218, %v220
      %v222 = vrot.slane %v215, %v221
      %v224 = vmul.f32 %v210, %v222
      %v225 = vld [vmem:[%s1] sm:$0x7]
      %227 = vset.pattern.permute.xlu0 0
      %228 = vperm.xlu0 %227, %v225
      %v229 = vpop.permute.xlu0 %228
      %v231 = vunpack.c.l.s4 839922192
      %v232 = vunpack.c.0.s8 %v231
      %v233 = vlaneseq
      %v234 = vshrl.u32 %v233, 7
      %v235 = vsub.s32 %v232, %v234
      %v236 = vrot.slane %v229, %v235
      %v238 = vadd.f32 %v224, %v236
      %239 = vst [vmem:[%s208] sm:$0x77] %v238
      %s240 = smul.u32 2, %s19
      %p241 = scmp.lt.s32.totalorder %s18, 1
      %s242 = scalar_select %p241, %s18, 1
      %p243 = scmp.lt.s32.totalorder %s240, 1
      %s244 = scalar_select %p243, %s240, 1
      %s245 = smul.addr %s242, 2
      %s246 = sadd.s32 %s244, %s245
      %s247 = smul.addr %s246, 4
      %s248 = scalar_lea.vmem %s3, %s247
      // Predicated region
      $region33: #{tpu_custom_call.1} parent=31 // pred_check
        %p249 = pneg %p116
      $region34: #{tpu_custom_call.1} parent=31 // pred_check_branch
        %251 = sbr.rel (%p249) target = $region36
      $region35: #{tpu_custom_call.1} parent=31 // pred_region
        %s252 = smul.u32 2, %s19
      $region36: #{tpu_custom_call.1} parent=31 // pred_fallthru
        _
    $region32: #{tpu_custom_call.1} parent=5 // pred_fallthru
      _
    %p253 = scmp.le.s32.totalorder 2, %s9
    // Predicated region
    $region37: #{tpu_custom_call.1} parent=5 // pred_check
      %p254 = pneg %p253
    $region38: #{tpu_custom_call.1} parent=5 // pred_check_branch
      %256 = sbr.rel (%p254) target = $region40
    $region39: #{tpu_custom_call.1} parent=5 // pred_region
      %s257 = ssub.s32 %s9, 2
      // Predicated region
      $region41: #{tpu_custom_call.1} parent=39 // pred_check
        %p258 = pneg %p122
      $region42: #{tpu_custom_call.1} parent=39 // pred_check_branch
        %260 = sbr.rel (%p258) target = $region44
      $region43: #{tpu_custom_call.1} parent=39 // pred_region
        %s261 = smul.u32 2, %s21
        %p262 = scmp.lt.s32.totalorder %s20, 1
        %s263 = scalar_select %p262, %s20, 1
        %p264 = scmp.lt.s32.totalorder %s261, 1
        %s265 = scalar_select %p264, %s261, 1
        %s266 = smul.addr %s263, 2
        %s267 = sadd.s32 %s265, %s266
        %s268 = smul.addr %s267, 4
        %s269 = scalar_lea.vmem %s3, %s268
      $region44: #{tpu_custom_call.1} parent=39 // pred_fallthru
        _
    $region40: #{tpu_custom_call.1} parent=5 // pred_fallthru
      _
  $region6: #{tpu_custom_call.1} parent=0 // loop_footer
    %s13 = sadd.s32 1, %s9
  $region7: #{tpu_custom_call.1} parent=0 // loop_footer_branch
    %8 = sbr.rel target = $region3
  $region8: #{tpu_custom_call.1} parent=0 // loop_exit
    _

</llo_original>
